<compile_context>
chip_gen: v6e
topology: v6e:2x2x1
jax: 0.10.0
libtpu: 0.0.40
codegen_flags: <defaults>
</compile_context>

<pallas_src>
import functools

import jax
import jax.numpy as jnp
from jax.experimental import pallas as pl
from jax.experimental.pallas import tpu as pltpu


def alpha_net_kernel(x_ref, w1_ref, b1_ref, w2_ref, b2_ref, w3_ref, b3_ref, o_ref):
    # x arrives in its original dtype (f32); cast to the matmul operand dtype
    # here instead of a separate wrapper-side XLA pad/cast pass over HBM.
    x = x_ref[...].astype(w1_ref.dtype)
    # Layer 1: Linear(input -> hidden_padded) + ReLU   (bf16 operands, f32 acc)
    h1 = jnp.dot(x, w1_ref[...], preferred_element_type=jnp.float32)
    h1 = jnp.maximum(h1 + b1_ref[...], 0.0)                       # f32 elementwise
    # Layer 2: Linear(hidden_padded -> hidden_padded) + ReLU
    h2 = jnp.dot(h1.astype(w2_ref.dtype), w2_ref[...],
                 preferred_element_type=jnp.float32)
    h2 = jnp.maximum(h2 + b2_ref[...], 0.0)
    # Layer 3: Linear(hidden_padded -> 1) as a lane reduction against the
    # (1, hp) weight row (padded lanes are zero, so the 128-lane sum equals the
    # real 100-lane sum).  Produces a (tm, 1) column written directly to o_ref.
    out = jnp.sum(h2 * w3_ref[...], axis=-1, keepdims=True) + b3_ref[...]
    o_ref[...] = out.astype(o_ref.dtype)


def _round_up(x, m):
    return ((x + m - 1) // m) * m


def _pad_to(a, shape):
    return jnp.pad(a, [(0, s - d) for d, s in zip(a.shape, shape)])


@functools.partial(jax.jit, static_argnames=("tm", "compute_dtype"))
def alpha_net_forward(x, w1, b1, w2, b2, w3, b3, *, tm=4096,
                      compute_dtype=jnp.bfloat16):
    """x: (B, input_dim); weights in (in, out) layout, biases (1, out).

    Returns (B, 1) float32, identical math to the PyTorch module (up to the
    bf16 operand rounding of the matmuls; accumulation is f32).
    """
    B, din = x.shape
    hidden = w1.shape[1]

    # --- weight layout padding (tiny, done once per jit) ---------------------
    hp = _round_up(max(hidden, 128), 128)   # hidden -> multiple of 128 lanes

    w1p = _pad_to(w1, (din, hp)).astype(compute_dtype)
    b1p = _pad_to(b1, (1, hp)).astype(jnp.float32)
    w2p = _pad_to(w2, (hp, hp)).astype(compute_dtype)
    b2p = _pad_to(b2, (1, hp)).astype(jnp.float32)
    w3p = _pad_to(w3.T, (1, hp)).astype(jnp.float32)   # (1, hp) row for lane reduce
    b3p = b3.reshape(1, 1).astype(jnp.float32)

    # --- batch tiling ---------------------------------------------------------
    # Big tiles amortize the ~0.35 us per-grid-step overhead, but cap so the
    # grid keeps >= 2 steps when the batch allows it (v7x: 2 TensorCores).
    # No wrapper-side padding of x: grid = cdiv, last partial tile is handled
    # by Pallas (OOB rows are dropped on write; rows are independent).
    tm_eff = min(tm, _round_up(pl.cdiv(B, 2), 128), _round_up(B, 8))
    tm_eff = max(tm_eff, 8)
    grid = (pl.cdiv(B, tm_eff),)

    const = lambda i: (0, 0)                # weights resident across grid steps

    out = pl.pallas_call(
        alpha_net_kernel,
        out_shape=jax.ShapeDtypeStruct((B, 1), jnp.float32),
        grid=grid,
        in_specs=[
            # x streamed in original f32; cast happens in-kernel.
            # (If a profile ever shows exposed x DMA, add
            #  pipeline_mode=pl.Buffered(3) here.)
            pl.BlockSpec((tm_eff, din), lambda i: (i, 0)),
            pl.BlockSpec((din, hp), const),                  # w1
            pl.BlockSpec((1, hp), const),                    # b1
            pl.BlockSpec((hp, hp), const),                   # w2
            pl.BlockSpec((1, hp), const),                    # b2
            pl.BlockSpec((1, hp), const),                    # w3 (row layout)
            pl.BlockSpec((1, 1), const),                     # b3
        ],
        out_specs=pl.BlockSpec((tm_eff, 1), lambda i: (i, 0)),
        compiler_params=pltpu.CompilerParams(
            dimension_semantics=("parallel",),               # v7x: 2nd TC
            vmem_limit_bytes=32 * 1024 * 1024),              # headroom on v5e
    )(x, w1p, b1p, w2p, b2p, w3p, b3p)

    return out


def init_params(key, input_dim, hidden_dim=100, output_dim=1):
    """Deterministic synthetic init (uniform, PyTorch-Linear-style fan_in bound)."""
    ks = jax.random.split(key, 6)

    def lin(kw, kb, fan_in, fan_out):
        bound = 1.0 / jnp.sqrt(fan_in)
        w = jax.random.uniform(kw, (fan_in, fan_out), jnp.float32, -bound, bound)
        b = jax.random.uniform(kb, (1, fan_out), jnp.float32, -bound, bound)
        return w, b

    w1, b1 = lin(ks[0], ks[1], input_dim, hidden_dim)
    w2, b2 = lin(ks[2], ks[3], hidden_dim, hidden_dim)
    w3, b3 = lin(ks[4], ks[5], hidden_dim, output_dim)
    return w1, b1, w2, b2, w3, b3


if __name__ == "__main__":
    key = jax.random.PRNGKey(0)
    k_x, k_p = jax.random.split(key)

    batch, input_dim, hidden_dim = 8, 32, 100
    x = jax.random.normal(k_x, (batch, input_dim), jnp.float32)
    w1, b1, w2, b2, w3, b3 = init_params(k_p, input_dim, hidden_dim)

    out = alpha_net_forward(x, w1, b1, w2, b2, w3, b3)
    out = jax.block_until_ready(out)

    # Pure-JAX f32 reference; tolerance loosened for bf16 matmul operands
    # (accumulation is f32).
    h = jnp.maximum(x @ w1 + b1, 0.0)
    h = jnp.maximum(h @ w2 + b2, 0.0)
    ref = h @ w3 + b3
    assert out.shape == (batch, 1), out.shape
    rel_err = jnp.max(jnp.abs(out - ref)) / (jnp.max(jnp.abs(ref)) + 1e-6)
    assert rel_err < 5e-2, rel_err

    # Also sanity-check the pure-f32 path against the reference.
    out_f32 = jax.block_until_ready(
        alpha_net_forward(x, w1, b1, w2, b2, w3, b3, compute_dtype=jnp.float32))
    assert jnp.allclose(out_f32, ref, atol=1e-4, rtol=1e-4), \
        jnp.abs(out_f32 - ref).max()

    # Exercise a larger, non-divisible batch to cover the partial-tile /
    # multi-step-grid path.
    xb = jax.random.normal(k_x, (1031, input_dim), jnp.float32)
    out_b = jax.block_until_ready(alpha_net_forward(xb, w1, b1, w2, b2, w3, b3))
    hb = jnp.maximum(xb @ w1 + b1, 0.0)
    hb = jnp.maximum(hb @ w2 + b2, 0.0)
    ref_b = hb @ w3 + b3
    rel_err_b = jnp.max(jnp.abs(out_b - ref_b)) / (jnp.max(jnp.abs(ref_b)) + 1e-6)
    assert out_b.shape == (1031, 1) and rel_err_b < 5e-2, (out_b.shape, rel_err_b)

    print("KERNEL_OK")
</pallas_src>

<mosaic_0001>
module attributes {stable_mosaic.version = 11 : i64} {
  func.func @alpha_net_kernel(%arg0: i32, %arg1: memref<8x32xf32, #tpu.memory_space<vmem>>, %arg2: memref<32x128xbf16, #tpu.memory_space<vmem>>, %arg3: memref<1x128xf32, #tpu.memory_space<vmem>>, %arg4: memref<128x128xbf16, #tpu.memory_space<vmem>>, %arg5: memref<1x128xf32, #tpu.memory_space<vmem>>, %arg6: memref<1x128xf32, #tpu.memory_space<vmem>>, %arg7: memref<1x1xf32, #tpu.memory_space<vmem>>, %arg8: memref<8x1xf32, #tpu.memory_space<vmem>>) attributes {dimension_semantics = [#tpu.dimension_semantics<parallel>], iteration_bounds = array<i64: 1>, scalar_prefetch = 0 : i64, scratch_operands = 0 : i64, tpu.core_type = #tpu.core_type<tc>, window_params = [{transform_indices = @transform_0, window_bounds = array<i64: 8, 32>}, {pipeline_mode = #tpu.pipeline_mode<synchronous>, transform_indices = @transform_1, window_bounds = array<i64: 32, 128>}, {pipeline_mode = #tpu.pipeline_mode<synchronous>, transform_indices = @transform_2, window_bounds = array<i64: 1, 128>}, {pipeline_mode = #tpu.pipeline_mode<synchronous>, transform_indices = @transform_3, window_bounds = array<i64: 128, 128>}, {pipeline_mode = #tpu.pipeline_mode<synchronous>, transform_indices = @transform_4, window_bounds = array<i64: 1, 128>}, {pipeline_mode = #tpu.pipeline_mode<synchronous>, transform_indices = @transform_5, window_bounds = array<i64: 1, 128>}, {pipeline_mode = #tpu.pipeline_mode<synchronous>, transform_indices = @transform_6, window_bounds = array<i64: 1, 1>}, {transform_indices = @transform_7, window_bounds = array<i64: 8, 1>}]} {
    %c0 = arith.constant 0 : index
    %c0_0 = arith.constant 0 : index
    %0 = vector.load %arg1[%c0, %c0_0] : memref<8x32xf32, #tpu.memory_space<vmem>>, vector<8x32xf32>
    %1 = arith.truncf %0 : vector<8x32xf32> to vector<8x32xbf16>
    %c0_1 = arith.constant 0 : index
    %c0_2 = arith.constant 0 : index
    %2 = vector.load %arg2[%c0_1, %c0_2] : memref<32x128xbf16, #tpu.memory_space<vmem>>, vector<32x128xbf16>
    %cst = arith.constant dense<0.000000e+00> : vector<8x128xf32>
    %3 = tpu.matmul %1, %2, %cst {dimension_numbers = #tpu.dot_dimension_numbers<[1], [0], [0], [1], [0, 0, 1, 1], [], []>} : vector<8x32xbf16>, vector<32x128xbf16>, vector<8x128xf32> -> vector<8x128xf32>
    %c0_3 = arith.constant 0 : index
    %c0_4 = arith.constant 0 : index
    %4 = vector.load %arg3[%c0_3, %c0_4] : memref<1x128xf32, #tpu.memory_space<vmem>>, vector<1x128xf32>
    %5 = vector.broadcast %4 : vector<1x128xf32> to vector<8x128xf32>
    %6 = arith.addf %3, %5 : vector<8x128xf32>
    %cst_5 = arith.constant 0.000000e+00 : f32
    %7 = vector.broadcast %cst_5 : f32 to vector<8x128xf32>
    %8 = arith.maximumf %6, %7 : vector<8x128xf32>
    %9 = arith.truncf %8 : vector<8x128xf32> to vector<8x128xbf16>
    %c0_6 = arith.constant 0 : index
    %c0_7 = arith.constant 0 : index
    %10 = vector.load %arg4[%c0_6, %c0_7] : memref<128x128xbf16, #tpu.memory_space<vmem>>, vector<128x128xbf16>
    %cst_8 = arith.constant dense<0.000000e+00> : vector<8x128xf32>
    %11 = tpu.matmul %9, %10, %cst_8 {dimension_numbers = #tpu.dot_dimension_numbers<[1], [0], [0], [1], [0, 0, 1, 1], [], []>} : vector<8x128xbf16>, vector<128x128xbf16>, vector<8x128xf32> -> vector<8x128xf32>
    %c0_9 = arith.constant 0 : index
    %c0_10 = arith.constant 0 : index
    %12 = vector.load %arg5[%c0_9, %c0_10] : memref<1x128xf32, #tpu.memory_space<vmem>>, vector<1x128xf32>
    %13 = vector.broadcast %12 : vector<1x128xf32> to vector<8x128xf32>
    %14 = arith.addf %11, %13 : vector<8x128xf32>
    %cst_11 = arith.constant 0.000000e+00 : f32
    %15 = vector.broadcast %cst_11 : f32 to vector<8x128xf32>
    %16 = arith.maximumf %14, %15 : vector<8x128xf32>
    %c0_12 = arith.constant 0 : index
    %c0_13 = arith.constant 0 : index
    %17 = vector.load %arg6[%c0_12, %c0_13] : memref<1x128xf32, #tpu.memory_space<vmem>>, vector<1x128xf32>
    %18 = vector.broadcast %17 : vector<1x128xf32> to vector<8x128xf32>
    %19 = arith.mulf %16, %18 : vector<8x128xf32>
    %cst_14 = arith.constant dense<0.000000e+00> : vector<8xf32>
    %20 = vector.multi_reduction <add>, %19, %cst_14 [1] : vector<8x128xf32> to vector<8xf32>
    %21 = vector.shape_cast %20 : vector<8xf32> to vector<8x1xf32>
    %c0_15 = arith.constant 0 : index
    %c0_16 = arith.constant 0 : index
    %22 = vector.load %arg7[%c0_15, %c0_16] : memref<1x1xf32, #tpu.memory_space<vmem>>, vector<1x1xf32>
    %23 = vector.broadcast %22 : vector<1x1xf32> to vector<8x1xf32>
    %24 = arith.addf %21, %23 : vector<8x1xf32>
    %c0_17 = arith.constant 0 : index
    %c0_18 = arith.constant 0 : index
    %25 = vector.load %arg8[%c0_17, %c0_18] : memref<8x1xf32, #tpu.memory_space<vmem>>, vector<8x1xf32>
    tpu.vector_store %arg8[%c0_17, %c0_18], %24 {strides = array<i32>} : memref<8x1xf32, #tpu.memory_space<vmem>>, vector<8x1xf32>,
    return
  }
  func.func @transform_0(%arg0: i32) -> (i32, i32) {
    %c0_i32 = arith.constant 0 : i32
    %c0_i32_0 = arith.constant 0 : i32
    return %arg0, %c0_i32 : i32, i32
  }
  func.func @transform_1(%arg0: i32) -> (i32, i32) {
    %c0_i32 = arith.constant 0 : i32
    %c0_i32_0 = arith.constant 0 : i32
    %c0_i32_1 = arith.constant 0 : i32
    return %c0_i32, %c0_i32_0 : i32, i32
  }
  func.func @transform_2(%arg0: i32) -> (i32, i32) {
    %c0_i32 = arith.constant 0 : i32
    %c0_i32_0 = arith.constant 0 : i32
    %c0_i32_1 = arith.constant 0 : i32
    return %c0_i32, %c0_i32_0 : i32, i32
  }
  func.func @transform_3(%arg0: i32) -> (i32, i32) {
    %c0_i32 = arith.constant 0 : i32
    %c0_i32_0 = arith.constant 0 : i32
    %c0_i32_1 = arith.constant 0 : i32
    return %c0_i32, %c0_i32_0 : i32, i32
  }
  func.func @transform_4(%arg0: i32) -> (i32, i32) {
    %c0_i32 = arith.constant 0 : i32
    %c0_i32_0 = arith.constant 0 : i32
    %c0_i32_1 = arith.constant 0 : i32
    return %c0_i32, %c0_i32_0 : i32, i32
  }
  func.func @transform_5(%arg0: i32) -> (i32, i32) {
    %c0_i32 = arith.constant 0 : i32
    %c0_i32_0 = arith.constant 0 : i32
    %c0_i32_1 = arith.constant 0 : i32
    return %c0_i32, %c0_i32_0 : i32, i32
  }
  func.func @transform_6(%arg0: i32) -> (i32, i32) {
    %c0_i32 = arith.constant 0 : i32
    %c0_i32_0 = arith.constant 0 : i32
    %c0_i32_1 = arith.constant 0 : i32
    return %c0_i32, %c0_i32_0 : i32, i32
  }
  func.func @transform_7(%arg0: i32) -> (i32, i32) {
    %c0_i32 = arith.constant 0 : i32
    %c0_i32_0 = arith.constant 0 : i32
    return %arg0, %c0_i32 : i32, i32
  }
}

</mosaic_0001>

<llo_original>
// kernel: alpha_net_forward.1
$region0: #{alpha_net_forward.1}
  #allocation0 [shape = 'u32[]', space=smem, size = 0x4, offset = 0x4, fixed_abs, tag = 'smem constant byte address 0x4 - core index']
  #allocation1 [shape = 'u32[144,128]{1,0:T(1,128)}', space=vmem, size = 0x12000, scoped, tag = 'internal scratch']
  #allocation2 [shape = 'f32[1,1]{1,0:T(1,128)S(1)}', space=vmem, size = 0x200, scoped, tag = 'scoped memory for alpha_net_forward.1']
  %s0 = inlined_call_operand.vmem [shape: f32[8,32], index: 0, kind: input, shape index: {}]
  %s1 = inlined_call_operand.vmem [shape: bf16[32,128], index: 1, kind: input, shape index: {}]
  %s2 = inlined_call_operand.vmem [shape: f32[1,128], index: 2, kind: input, shape index: {}]
  %s3 = inlined_call_operand.vmem [shape: bf16[128,128], index: 3, kind: input, shape index: {}]
  %s4 = inlined_call_operand.vmem [shape: f32[1,128], index: 4, kind: input, shape index: {}]
  %s5 = inlined_call_operand.vmem [shape: f32[1,128], index: 5, kind: input, shape index: {}]
  %s6 = inlined_call_operand.<no memory space> [shape: f32[1,1], index: 6, kind: input, shape index: {}]
  %s7 = inlined_call_operand.vmem [shape: f32[8,1], index: 7, kind: output, shape index: {}]
  %s8 = sld [smem:[#allocation0]]
  $region38: #{alpha_net_forward.1} parent=0
    _
  %s10 = ssub.s32 1, %s8
  %s11 = scalar_select 0, %s10, %s8
  %v12 = vstv %s6
  %13 = vst [vmem:[#allocation2] sm:$0x1] %v12
  // Predicated region
  $region2: #{alpha_net_forward.1} parent=0 // pred_check
    _
  $region3: #{alpha_net_forward.1} parent=0 // pred_check_branch
    %15 = sbr.rel (0) target = $region5
  $region4: #{alpha_net_forward.1} parent=0 // pred_region
    _
  $region5: #{alpha_net_forward.1} parent=0 // pred_fallthru
    _
  // Predicated region
  $region6: #{alpha_net_forward.1} parent=0 // pred_check
    _
  $region7: #{alpha_net_forward.1} parent=0 // pred_check_branch
    %17 = sbr.rel (0) target = $region9
  $region8: #{alpha_net_forward.1} parent=0 // pred_region
    _
  $region9: #{alpha_net_forward.1} parent=0 // pred_fallthru
    _
  // Predicated region
  $region10: #{alpha_net_forward.1} parent=0 // pred_check
    _
  $region11: #{alpha_net_forward.1} parent=0 // pred_check_branch
    %19 = sbr.rel (0) target = $region13
  $region12: #{alpha_net_forward.1} parent=0 // pred_region
    _
  $region13: #{alpha_net_forward.1} parent=0 // pred_fallthru
    _
  // Predicated region
  $region14: #{alpha_net_forward.1} parent=0 // pred_check
    _
  $region15: #{alpha_net_forward.1} parent=0 // pred_check_branch
    %21 = sbr.rel (0) target = $region17
  $region16: #{alpha_net_forward.1} parent=0 // pred_region
    _
  $region17: #{alpha_net_forward.1} parent=0 // pred_fallthru
    _
  // Predicated region
  $region18: #{alpha_net_forward.1} parent=0 // pred_check
    _
  $region19: #{alpha_net_forward.1} parent=0 // pred_check_branch
    %23 = sbr.rel (0) target = $region21
  $region20: #{alpha_net_forward.1} parent=0 // pred_region
    _
  $region21: #{alpha_net_forward.1} parent=0 // pred_fallthru
    _
  // Predicated region
  $region22: #{alpha_net_forward.1} parent=0 // pred_check
    _
  $region23: #{alpha_net_forward.1} parent=0 // pred_check_branch
    %25 = sbr.rel (0) target = $region25
  $region24: #{alpha_net_forward.1} parent=0 // pred_region
    _
  $region25: #{alpha_net_forward.1} parent=0 // pred_fallthru
    _
  // Predicated region
  $region26: #{alpha_net_forward.1} parent=0 // pred_check
    _
  $region27: #{alpha_net_forward.1} parent=0 // pred_check_branch
    %27 = sbr.rel (0) target = $region29
  $region28: #{alpha_net_forward.1} parent=0 // pred_region
    _
  $region29: #{alpha_net_forward.1} parent=0 // pred_fallthru
    _
  %v29 = vld [vmem:[%s0] sm:$0xff]
  %v30 = vpack.c.bf16 %v29, %v29
  %v31 = vld [vmem:[%s1] sm:$0xf]
  %v32 = vld [vmem:[%s1 + $0x4] sm:$0xf]
  %v33 = vld [vmem:[%s1 + $0x8] sm:$0xf]
  %v34 = vld [vmem:[%s1 + $0xc] sm:$0xf]
  %v35 = vld [vmem:[%s2] sm:$0x1]
  %v37 = vlaneseq
  %v38 = vshrl.u32 %v37, 7
  %v39 = vsub.s32 0, %v38
  %v40 = vrot.slane %v35, %v39
  %v46 = vunpack.c.l.b16 %v31
  %v47 = vunpack.c.l.b16 %v32
  %v48 = vunpack.c.l.b16 %v33
  %v49 = vunpack.c.l.b16 %v34
  %v50 = vpack.c.b16 %v47, %v46
  %v51 = vpack.c.b16 %v49, %v48
  %vm54 = vcmask 261120
  %v56 = vsel %vm54, %v30, 0
  %58 = vmatprep.subr.bf16.mxu0 0
  %59 = vmatpush1.bf16.msra.mxu0 0
  %60 = vmatprep.subr.bf16.mxu0 0
  %61 = vmatpush1.bf16.msra.mxu0 0
  %62 = vmatprep.subr.bf16.mxu0 0
  %63 = vmatpush1.bf16.msra.mxu0 0
  %64 = vmatprep.subr.bf16.mxu0 0
  %65 = vmatpush1.bf16.msra.mxu0 0
  %66 = vmatprep.subr.bf16.mxu0 0
  %67 = vmatpush1.bf16.msra.mxu0 0
  %68 = vmatprep.subr.bf16.mxu0 0
  %69 = vmatpush1.bf16.msra.mxu0 0
  %70 = vmatprep.subr.bf16.mxu0 0
  %71 = vmatpush1.bf16.msra.mxu0 %v51
  %72 = vmatprep.subr.bf16.mxu0 0
  %73 = vmatpush1.bf16.msra.mxu0 %v50
  %74 = vmatprep.subr.bf16.mxu0 0
  %75 = vmatpush2.bf16.msra.mxu0 0
  %76 = vmatprep.subr.bf16.mxu0 0
  %77 = vmatpush2.bf16.msra.mxu0 0
  %78 = vmatprep.subr.bf16.mxu0 0
  %79 = vmatpush2.bf16.msra.mxu0 0
  %80 = vmatprep.subr.bf16.mxu0 0
  %81 = vmatpush2.bf16.msra.mxu0 0
  %82 = vmatprep.subr.bf16.mxu0 0
  %83 = vmatpush2.bf16.msra.mxu0 0
  %84 = vmatprep.subr.bf16.mxu0 0
  %85 = vmatpush2.bf16.msra.mxu0 0
  %86 = vmatprep.subr.bf16.mxu0 0
  %87 = vmatpush2.bf16.msra.mxu0 0
  %88 = vmatprep.subr.bf16.mxu0 0
  %89 = vmatpush2.bf16.msra.mxu0 0
  %90 = vmatprep.mubr.bf16.mxu0 0
  %91 = vmatmul.mubr.bf16.gmra.mxu0 %v56
  %v92 = vpop.f32.mrf.mxu0
  %v93 = vadd.f32 %v40, %v92
  %v94 = vpop.f32.mrf.mxu0
  %v95 = vpop.f32.mrf.mxu0
  %v96 = vpop.f32.mrf.mxu0
  %97 = vdwg.mxu0
  %v98 = vmax.f32 %v93, 0.0
  %v99 = vpack.c.bf16 %v98, %v98
  %v100 = vld [vmem:[%s3] sm:$0xf]
  %v101 = vld [vmem:[%s3 + $0x4] sm:$0xf]
  %v102 = vld [vmem:[%s3 + $0x8] sm:$0xf]
  %v103 = vld [vmem:[%s3 + $0xc] sm:$0xf]
  %v104 = vld [vmem:[%s3 + $0x10] sm:$0xf]
  %v105 = vld [vmem:[%s3 + $0x14] sm:$0xf]
  %v106 = vld [vmem:[%s3 + $0x18] sm:$0xf]
  %v107 = vld [vmem:[%s3 + $0x1c] sm:$0xf]
  %v108 = vld [vmem:[%s3 + $0x20] sm:$0xf]
  %v109 = vld [vmem:[%s3 + $0x24] sm:$0xf]
  %v110 = vld [vmem:[%s3 + $0x28] sm:$0xf]
  %v111 = vld [vmem:[%s3 + $0x2c] sm:$0xf]
  %v112 = vld [vmem:[%s3 + $0x30] sm:$0xf]
  %v113 = vld [vmem:[%s3 + $0x34] sm:$0xf]
  %v114 = vld [vmem:[%s3 + $0x38] sm:$0xf]
  %v115 = vld [vmem:[%s3 + $0x3c] sm:$0xf]
  %v116 = vld [vmem:[%s4] sm:$0x1]
  %v118 = vlaneseq
  %v119 = vshrl.u32 %v118, 7
  %v120 = vsub.s32 0, %v119
  %v121 = vrot.slane %v116, %v120
  %v139 = vunpack.c.l.b16 %v100
  %v140 = vunpack.c.l.b16 %v101
  %v141 = vunpack.c.l.b16 %v102
  %v142 = vunpack.c.l.b16 %v103
  %v143 = vunpack.c.l.b16 %v104
  %v144 = vunpack.c.l.b16 %v105
  %v145 = vunpack.c.l.b16 %v106
  %v146 = vunpack.c.l.b16 %v107
  %v147 = vunpack.c.l.b16 %v108
  %v148 = vunpack.c.l.b16 %v109
  %v149 = vunpack.c.l.b16 %v110
  %v150 = vunpack.c.l.b16 %v111
  %v151 = vunpack.c.l.b16 %v112
  %v152 = vunpack.c.l.b16 %v113
  %v153 = vunpack.c.l.b16 %v114
  %v154 = vunpack.c.l.b16 %v115
  %v155 = vpack.c.b16 %v140, %v139
  %v156 = vpack.c.b16 %v142, %v141
  %v157 = vpack.c.b16 %v144, %v143
  %v158 = vpack.c.b16 %v146, %v145
  %v159 = vpack.c.b16 %v148, %v147
  %v160 = vpack.c.b16 %v150, %v149
  %v161 = vpack.c.b16 %v152, %v151
  %v162 = vpack.c.b16 %v154, %v153
  %171 = vmatprep.subr.bf16.mxu0 0
  %172 = vmatpush1.bf16.msra.mxu0 %v162
  %173 = vmatprep.subr.bf16.mxu0 0
  %174 = vmatpush1.bf16.msra.mxu0 %v161
  %175 = vmatprep.subr.bf16.mxu0 0
  %176 = vmatpush1.bf16.msra.mxu0 %v160
  %177 = vmatprep.subr.bf16.mxu0 0
  %178 = vmatpush1.bf16.msra.mxu0 %v159
  %179 = vmatprep.subr.bf16.mxu0 0
  %180 = vmatpush1.bf16.msra.mxu0 %v158
  %181 = vmatprep.subr.bf16.mxu0 0
  %182 = vmatpush1.bf16.msra.mxu0 %v157
  %183 = vmatprep.subr.bf16.mxu0 0
  %184 = vmatpush1.bf16.msra.mxu0 %v156
  %185 = vmatprep.subr.bf16.mxu0 0
  %186 = vmatpush1.bf16.msra.mxu0 %v155
  %187 = vmatprep.subr.bf16.mxu0 0
  %188 = vmatpush2.bf16.msra.mxu0 0
  %189 = vmatprep.subr.bf16.mxu0 0
  %190 = vmatpush2.bf16.msra.mxu0 0
  %191 = vmatprep.subr.bf16.mxu0 0
  %192 = vmatpush2.bf16.msra.mxu0 0
  %193 = vmatprep.subr.bf16.mxu0 0
  %194 = vmatpush2.bf16.msra.mxu0 0
  %195 = vmatprep.subr.bf16.mxu0 0
  %196 = vmatpush2.bf16.msra.mxu0 0
  %197 = vmatprep.subr.bf16.mxu0 0
  %198 = vmatpush2.bf16.msra.mxu0 0
  %199 = vmatprep.subr.bf16.mxu0 0
  %200 = vmatpush2.bf16.msra.mxu0 0
  %201 = vmatprep.subr.bf16.mxu0 0
  %202 = vmatpush2.bf16.msra.mxu0 0
  %203 = vmatprep.mubr.bf16.mxu0 0
  %204 = vmatmul.mubr.bf16.gmra.mxu0 %v99
  %v205 = vpop.f32.mrf.mxu0
  %v206 = vadd.f32 %v121, %v205
  %v207 = vpop.f32.mrf.mxu0
  %v208 = vpop.f32.mrf.mxu0
  %v209 = vpop.f32.mrf.mxu0
  %210 = vdwg.mxu0
  %v211 = vmax.f32 %v206, 0.0
  %v212 = vld [vmem:[%s5] sm:$0x1]
  %v214 = vlaneseq
  %v215 = vshrl.u32 %v214, 7
  %v216 = vsub.s32 0, %v215
  %v217 = vrot.slane %v212, %v216
  %v219 = vmul.f32 %v211, %v217
  %220 = vadd.xlane.f32.xlu0 %v219
  %v221 = vpop.xlane.xlu0 %220
  %v222 = vld [vmem:[#allocation2] sm:$0x1]
  %v224 = vlaneseq
  %v225 = vshrl.u32 %v224, 7
  %v226 = vsub.s32 0, %v225
  %v227 = vrot.slane %v222, %v226
  %v229 = vadd.f32 %v221, %v227
  %vm230 = vcmask 7168
  %231 = vst.msk [vmem:[%s7] sm:$0xff] %vm230, %v229
  // Predicated region
  $region30: #{alpha_net_forward.1} parent=0 // pred_check
    _
  $region31: #{alpha_net_forward.1} parent=0 // pred_check_branch
    %233 = sbr.rel (0) target = $region33
  $region32: #{alpha_net_forward.1} parent=0 // pred_region
    _
  $region33: #{alpha_net_forward.1} parent=0 // pred_fallthru
    _
  // Predicated region
  $region34: #{alpha_net_forward.1} parent=0 // pred_check
    _
  $region35: #{alpha_net_forward.1} parent=0 // pred_check_branch
    %235 = sbr.rel (0) target = $region37
  $region36: #{alpha_net_forward.1} parent=0 // pred_region
    _
  $region37: #{alpha_net_forward.1} parent=0 // pred_fallthru
    _

</llo_original>
